<compile_context>
chip_gen: v5e
topology: v5e:2x2
jax: 0.10.0
libtpu: 0.0.40
codegen_flags: <defaults>
</compile_context>

<pallas_src>
import math

import jax
import jax.numpy as jnp
from jax import lax
from jax.experimental import pallas as pl
from jax.experimental.pallas import tpu as pltpu

# Module hyper-parameters (defaults of the PyTorch module).
FEATS = 4
N_WINDOW = 8
N_HIDDEN = 16
N_LATENT = 8
N = FEATS * N_WINDOW          # 32
N_GMM = N                     # 32
BATCH = 2

PAD = 32                      # every layer zero-padded to (32, 32); max fan_in/out is 32
N_LAYERS = 8
ROW_PACK = 4                  # batch rows packed per vreg row
LANES = ROW_PACK * PAD        # 128
OUT_LANES = 3 * LANES         # 384: [z | x_hat | gamma] (packed layout)
BB_CAP = 2048                 # max batch rows per grid step
ROW_QUANT = ROW_PACK * 8      # 32 batch rows = 8 packed sublane rows (min tile)


def _round_up(x, m):
    return (x + m - 1) // m * m


def _dagmm_kernel(x_ref, w_ref, b_ref, s_ref, out_ref):
    x = x_ref[...]            # (rb, 128) f32 : 4 batch rows per vreg row
    seg = s_ref[...]          # (128, 128) f32 block-diagonal ones

    def dense(h, i):
        # Per-layer weight read keeps the live vreg set small.
        # bf16 MXU operands, f32 accumulation, f32 bias add.
        return (jnp.dot(h.astype(jnp.bfloat16), w_ref[i],
                        preferred_element_type=jnp.float32)
                + b_ref[i:i + 1, :])

    def seg_sum(v):
        # Sum over each 32-lane block and broadcast it back across the block,
        # all in one f32 MXU op (reduction + broadcast, no relayout).
        return jnp.dot(v, seg, preferred_element_type=jnp.float32)

    # ---------------- encoder ----------------
    h = jnp.tanh(dense(x, 0))
    h = jnp.tanh(dense(h, 1))
    z_c = dense(h, 2)                       # lanes 8:32 of every block are exactly 0

    # ---------------- decoder ----------------
    d = jnp.tanh(dense(z_c, 3))
    d = jnp.tanh(dense(d, 4))
    x_hat = jax.nn.sigmoid(dense(d, 5))

    # ---------------- reconstruction features (f32) ----------------
    sum_x = seg_sum(x * x)
    sum_xh = seg_sum(x_hat * x_hat)
    dot_xxh = seg_sum(x * x_hat)
    sum_d = jnp.maximum(sum_x + sum_xh - 2.0 * dot_xxh, 0.0)   # ||x - x_hat||^2
    # relative euclidean distance: ||x - x_hat|| / ||x|| (no eps, matches torch;
    # an all-zero input row yields inf here, as in the reference)
    rec_1 = jnp.sqrt(sum_d) * lax.rsqrt(sum_x)
    # cosine similarity: clamp each norm individually (matches F.cosine_similarity)
    rec_2 = (dot_xxh
             * lax.rsqrt(jnp.maximum(sum_x, 1e-16))
             * lax.rsqrt(jnp.maximum(sum_xh, 1e-16)))

    # z = [z_c | rec_1 | rec_2 | 0 ...] within each 32-lane block, assembled in vregs.
    lane = lax.broadcasted_iota(jnp.int32, z_c.shape, 1) & (PAD - 1)
    z = (z_c
         + jnp.where(lane == N_LATENT, rec_1, 0.0)
         + jnp.where(lane == N_LATENT + 1, rec_2, 0.0))

    # ---------------- estimate (GMM membership) ----------------
    e = jnp.tanh(dense(z, 6))
    # TODO(synk): nn.Dropout(0.5) is identity at inference; training-mode dropout not implemented.
    logits = dense(e, 7)
    # Softmax per 32-lane block.  Subtracting the per-vreg-row max (a constant within
    # every block) leaves each block's softmax unchanged and keeps exp arguments <= 0.
    m = jnp.max(logits, axis=1, keepdims=True)
    ex = jnp.exp(logits - m)
    gamma = ex / seg_sum(ex)                # exact normalisation: rows sum to 1

    # Three lane-aligned, unmasked 128-wide stores into the (rb, 384) slab.
    out_ref[:, 0 * LANES:1 * LANES] = z
    out_ref[:, 1 * LANES:2 * LANES] = x_hat
    out_ref[:, 2 * LANES:3 * LANES] = gamma


def dagmm_forward(x, w_all, b_all):
    """x: (batch, n_window, feats) float32. Returns (z_c, x_hat, z, gamma)."""
    x_shape = x.shape
    x2d = x.reshape(-1, N).astype(jnp.float32)
    b = x2d.shape[0]

    # Batch tiling: big blocks to amortize the ~0.35 us per-step pipeline overhead,
    # but >= 2 grid steps when the batch allows so both v7x TensorCores get work.
    b32 = _round_up(b, ROW_QUANT)
    n_steps = pl.cdiv(b32, BB_CAP)
    if n_steps == 1 and b32 >= 2 * ROW_QUANT:
        n_steps = 2
    bb = _round_up(pl.cdiv(b32, n_steps), ROW_QUANT)   # batch rows per step
    padded_b = bb * n_steps
    rb = bb // ROW_PACK                                # packed rows per step
    padded_r = padded_b // ROW_PACK

    if padded_b != b:
        # Edge-replicate (not zero-pad): a zero row hits rsqrt(0) and its inf/NaN
        # would leak into the 3 neighbouring packed rows via the matmuls.
        x2d = jnp.pad(x2d, ((0, padded_b - b), (0, 0)), mode="edge")

    x_packed = x2d.reshape(padded_r, LANES)            # free contiguous reshape

    # 32-lane segment-sum-and-broadcast matrix (block-diagonal ones), f32.
    seg = jnp.kron(jnp.eye(ROW_PACK, dtype=jnp.float32),
                   jnp.ones((PAD, PAD), jnp.float32))

    cost = pl.CostEstimate(
        flops=2 * padded_r * LANES * LANES * (N_LAYERS + 4),
        transcendentals=7 * padded_r * LANES,
        bytes_accessed=(padded_r * LANES * 4 + padded_r * OUT_LANES * 4
                        + N_LAYERS * LANES * LANES * 2
                        + N_LAYERS * LANES * 4 + LANES * LANES * 4),
    )

    slab = pl.pallas_call(
        _dagmm_kernel,
        out_shape=jax.ShapeDtypeStruct((padded_r, OUT_LANES), jnp.float32),
        grid_spec=pltpu.PrefetchScalarGridSpec(
            num_scalar_prefetch=0,
            grid=(n_steps,),
            in_specs=[
                pl.BlockSpec((rb, LANES), lambda i: (i, 0)),                  # x tile
                pl.BlockSpec((N_LAYERS, LANES, LANES), lambda i: (0, 0, 0)),  # weights (resident)
                pl.BlockSpec((N_LAYERS, LANES), lambda i: (0, 0)),            # biases  (resident)
                pl.BlockSpec((LANES, LANES), lambda i: (0, 0)),               # segment matrix
            ],
            out_specs=pl.BlockSpec((rb, OUT_LANES), lambda i: (i, 0)),
        ),
        compiler_params=pltpu.CompilerParams(
            dimension_semantics=("parallel",),
            vmem_limit_bytes=32 * 1024 * 1024),
        cost_estimate=cost,
    )(x_packed, w_all, b_all, seg)

    # Unpack the lane-packed slab (contiguous reshapes) and slice off padding.
    zp = slab[:, 0 * LANES:1 * LANES].reshape(padded_b, PAD)
    xp = slab[:, 1 * LANES:2 * LANES].reshape(padded_b, PAD)
    gp = slab[:, 2 * LANES:3 * LANES].reshape(padded_b, PAD)

    z_c = zp[:b, :N_LATENT]
    z = zp[:b, :N_LATENT + 2]
    x_hat = xp[:b, :N]
    gamma = gp[:b, :N_GMM]
    # gamma.view(x_shape) in the reference only works because n_gmm == n_window*feats.
    return z_c, x_hat.reshape(x_shape), z, gamma.reshape(x_shape)


def init_params(key):
    """PyTorch-style init: uniform(-1/sqrt(fan_in), 1/sqrt(fan_in)).

    Each layer's (in,out) weight is zero-padded to 32x32 and replicated into a
    128x128 block-diagonal (bf16); biases are zero-padded to 32 and tiled x4 (f32)."""
    dims = [
        (N, N_HIDDEN), (N_HIDDEN, N_HIDDEN), (N_HIDDEN, N_LATENT),        # encoder
        (N_LATENT, N_HIDDEN), (N_HIDDEN, N_HIDDEN), (N_HIDDEN, N),        # decoder
        (N_LATENT + 2, N_HIDDEN), (N_HIDDEN, N_GMM),                      # estimate
    ]
    eye = jnp.eye(ROW_PACK, dtype=jnp.float32)
    w_blocks, b_blocks = [], []
    for fan_in, fan_out in dims:
        key, kw, kb = jax.random.split(key, 3)
        bound = 1.0 / math.sqrt(fan_in)
        w = jax.random.uniform(kw, (fan_in, fan_out), jnp.float32, -bound, bound)
        bvec = jax.random.uniform(kb, (fan_out,), jnp.float32, -bound, bound)
        w32 = jnp.zeros((PAD, PAD), jnp.float32).at[:fan_in, :fan_out].set(w)
        b32 = jnp.zeros((PAD,), jnp.float32).at[:fan_out].set(bvec)
        w_blocks.append(jnp.kron(eye, w32))          # (128, 128) block-diagonal
        b_blocks.append(jnp.tile(b32, ROW_PACK))     # (128,)
    w_all = jnp.stack(w_blocks).astype(jnp.bfloat16)   # (8, 128, 128) bf16 = 256 KiB
    b_all = jnp.stack(b_blocks)                        # (8, 128) f32
    return w_all, b_all


if __name__ == "__main__":
    key = jax.random.PRNGKey(0)
    key, kx = jax.random.split(key)
    x = jax.random.normal(kx, (BATCH, N_WINDOW, FEATS), jnp.float32)

    w_all, b_all = init_params(key)

    fwd = jax.jit(dagmm_forward)
    z_c, x_hat, z, gamma = fwd(x, w_all, b_all)
    jax.block_until_ready((z_c, x_hat, z, gamma))

    assert z_c.shape == (BATCH, N_LATENT)
    assert x_hat.shape == x.shape
    assert z.shape == (BATCH, N_LATENT + 2)
    assert gamma.shape == x.shape
    assert bool(jnp.all(jnp.isfinite(gamma)))
    # softmax rows should sum to ~1 (exact-division normalisation)
    gsum = jnp.sum(gamma.reshape(BATCH, -1), axis=1)
    assert bool(jnp.all(jnp.abs(gsum - 1.0) < 1e-4))

    print("KERNEL_OK")
</pallas_src>

<mosaic_0001>
module attributes {stable_mosaic.version = 11 : i64} {
  func.func @_dagmm_kernel(%arg0: i32, %arg1: memref<8x128xf32, #tpu.memory_space<vmem>>, %arg2: memref<8x128x128xbf16, #tpu.memory_space<vmem>>, %arg3: memref<8x128xf32, #tpu.memory_space<vmem>>, %arg4: memref<128x128xf32, #tpu.memory_space<vmem>>, %arg5: memref<8x384xf32, #tpu.memory_space<vmem>>) attributes {dimension_semantics = [#tpu.dimension_semantics<parallel>], iteration_bounds = array<i64: 1>, scalar_prefetch = 0 : i64, scratch_operands = 0 : i64, tpu.core_type = #tpu.core_type<tc>, window_params = [{transform_indices = @transform_0, window_bounds = array<i64: 8, 128>}, {pipeline_mode = #tpu.pipeline_mode<synchronous>, transform_indices = @transform_1, window_bounds = array<i64: 8, 128, 128>}, {pipeline_mode = #tpu.pipeline_mode<synchronous>, transform_indices = @transform_2, window_bounds = array<i64: 8, 128>}, {pipeline_mode = #tpu.pipeline_mode<synchronous>, transform_indices = @transform_3, window_bounds = array<i64: 128, 128>}, {transform_indices = @transform_4, window_bounds = array<i64: 8, 384>}]} {
    %c0 = arith.constant 0 : index
    %c0_0 = arith.constant 0 : index
    %0 = vector.load %arg1[%c0, %c0_0] : memref<8x128xf32, #tpu.memory_space<vmem>>, vector<8x128xf32>
    %c0_1 = arith.constant 0 : index
    %c0_2 = arith.constant 0 : index
    %1 = vector.load %arg4[%c0_1, %c0_2] : memref<128x128xf32, #tpu.memory_space<vmem>>, vector<128x128xf32>
    %2 = arith.truncf %0 : vector<8x128xf32> to vector<8x128xbf16>
    %c0_3 = arith.constant 0 : index
    %c0_4 = arith.constant 0 : index
    %c0_5 = arith.constant 0 : index
    %3 = vector.load %arg2[%c0_3, %c0_4, %c0_5] : memref<8x128x128xbf16, #tpu.memory_space<vmem>>, vector<1x128x128xbf16>
    %4 = vector.shape_cast %3 : vector<1x128x128xbf16> to vector<128x128xbf16>
    %cst = arith.constant dense<0.000000e+00> : vector<8x128xf32>
    %5 = tpu.matmul %2, %4, %cst {dimension_numbers = #tpu.dot_dimension_numbers<[1], [0], [0], [1], [0, 0, 1, 1], [], []>} : vector<8x128xbf16>, vector<128x128xbf16>, vector<8x128xf32> -> vector<8x128xf32>
    %c0_6 = arith.constant 0 : index
    %c0_7 = arith.constant 0 : index
    %6 = vector.load %arg3[%c0_6, %c0_7] : memref<8x128xf32, #tpu.memory_space<vmem>>, vector<1x128xf32>
    %7 = vector.broadcast %6 : vector<1x128xf32> to vector<8x128xf32>
    %8 = arith.addf %5, %7 : vector<8x128xf32>
    %9 = math.tanh %8 : vector<8x128xf32>
    %10 = arith.truncf %9 : vector<8x128xf32> to vector<8x128xbf16>
    %c1 = arith.constant 1 : index
    %c0_8 = arith.constant 0 : index
    %c0_9 = arith.constant 0 : index
    %11 = vector.load %arg2[%c1, %c0_8, %c0_9] : memref<8x128x128xbf16, #tpu.memory_space<vmem>>, vector<1x128x128xbf16>
    %12 = vector.shape_cast %11 : vector<1x128x128xbf16> to vector<128x128xbf16>
    %cst_10 = arith.constant dense<0.000000e+00> : vector<8x128xf32>
    %13 = tpu.matmul %10, %12, %cst_10 {dimension_numbers = #tpu.dot_dimension_numbers<[1], [0], [0], [1], [0, 0, 1, 1], [], []>} : vector<8x128xbf16>, vector<128x128xbf16>, vector<8x128xf32> -> vector<8x128xf32>
    %c1_11 = arith.constant 1 : index
    %c0_12 = arith.constant 0 : index
    %14 = vector.load %arg3[%c1_11, %c0_12] : memref<8x128xf32, #tpu.memory_space<vmem>>, vector<1x128xf32>
    %15 = vector.broadcast %14 : vector<1x128xf32> to vector<8x128xf32>
    %16 = arith.addf %13, %15 : vector<8x128xf32>
    %17 = math.tanh %16 : vector<8x128xf32>
    %18 = arith.truncf %17 : vector<8x128xf32> to vector<8x128xbf16>
    %c2 = arith.constant 2 : index
    %c0_13 = arith.constant 0 : index
    %c0_14 = arith.constant 0 : index
    %19 = vector.load %arg2[%c2, %c0_13, %c0_14] : memref<8x128x128xbf16, #tpu.memory_space<vmem>>, vector<1x128x128xbf16>
    %20 = vector.shape_cast %19 : vector<1x128x128xbf16> to vector<128x128xbf16>
    %cst_15 = arith.constant dense<0.000000e+00> : vector<8x128xf32>
    %21 = tpu.matmul %18, %20, %cst_15 {dimension_numbers = #tpu.dot_dimension_numbers<[1], [0], [0], [1], [0, 0, 1, 1], [], []>} : vector<8x128xbf16>, vector<128x128xbf16>, vector<8x128xf32> -> vector<8x128xf32>
    %c2_16 = arith.constant 2 : index
    %c0_17 = arith.constant 0 : index
    %22 = vector.load %arg3[%c2_16, %c0_17] : memref<8x128xf32, #tpu.memory_space<vmem>>, vector<1x128xf32>
    %23 = vector.broadcast %22 : vector<1x128xf32> to vector<8x128xf32>
    %24 = arith.addf %21, %23 : vector<8x128xf32>
    %25 = arith.truncf %24 : vector<8x128xf32> to vector<8x128xbf16>
    %c3 = arith.constant 3 : index
    %c0_18 = arith.constant 0 : index
    %c0_19 = arith.constant 0 : index
    %26 = vector.load %arg2[%c3, %c0_18, %c0_19] : memref<8x128x128xbf16, #tpu.memory_space<vmem>>, vector<1x128x128xbf16>
    %27 = vector.shape_cast %26 : vector<1x128x128xbf16> to vector<128x128xbf16>
    %cst_20 = arith.constant dense<0.000000e+00> : vector<8x128xf32>
    %28 = tpu.matmul %25, %27, %cst_20 {dimension_numbers = #tpu.dot_dimension_numbers<[1], [0], [0], [1], [0, 0, 1, 1], [], []>} : vector<8x128xbf16>, vector<128x128xbf16>, vector<8x128xf32> -> vector<8x128xf32>
    %c3_21 = arith.constant 3 : index
    %c0_22 = arith.constant 0 : index
    %29 = vector.load %arg3[%c3_21, %c0_22] : memref<8x128xf32, #tpu.memory_space<vmem>>, vector<1x128xf32>
    %30 = vector.broadcast %29 : vector<1x128xf32> to vector<8x128xf32>
    %31 = arith.addf %28, %30 : vector<8x128xf32>
    %32 = math.tanh %31 : vector<8x128xf32>
    %33 = arith.truncf %32 : vector<8x128xf32> to vector<8x128xbf16>
    %c4 = arith.constant 4 : index
    %c0_23 = arith.constant 0 : index
    %c0_24 = arith.constant 0 : index
    %34 = vector.load %arg2[%c4, %c0_23, %c0_24] : memref<8x128x128xbf16, #tpu.memory_space<vmem>>, vector<1x128x128xbf16>
    %35 = vector.shape_cast %34 : vector<1x128x128xbf16> to vector<128x128xbf16>
    %cst_25 = arith.constant dense<0.000000e+00> : vector<8x128xf32>
    %36 = tpu.matmul %33, %35, %cst_25 {dimension_numbers = #tpu.dot_dimension_numbers<[1], [0], [0], [1], [0, 0, 1, 1], [], []>} : vector<8x128xbf16>, vector<128x128xbf16>, vector<8x128xf32> -> vector<8x128xf32>
    %c4_26 = arith.constant 4 : index
    %c0_27 = arith.constant 0 : index
    %37 = vector.load %arg3[%c4_26, %c0_27] : memref<8x128xf32, #tpu.memory_space<vmem>>, vector<1x128xf32>
    %38 = vector.broadcast %37 : vector<1x128xf32> to vector<8x128xf32>
    %39 = arith.addf %36, %38 : vector<8x128xf32>
    %40 = math.tanh %39 : vector<8x128xf32>
    %41 = arith.truncf %40 : vector<8x128xf32> to vector<8x128xbf16>
    %c5 = arith.constant 5 : index
    %c0_28 = arith.constant 0 : index
    %c0_29 = arith.constant 0 : index
    %42 = vector.load %arg2[%c5, %c0_28, %c0_29] : memref<8x128x128xbf16, #tpu.memory_space<vmem>>, vector<1x128x128xbf16>
    %43 = vector.shape_cast %42 : vector<1x128x128xbf16> to vector<128x128xbf16>
    %cst_30 = arith.constant dense<0.000000e+00> : vector<8x128xf32>
    %44 = tpu.matmul %41, %43, %cst_30 {dimension_numbers = #tpu.dot_dimension_numbers<[1], [0], [0], [1], [0, 0, 1, 1], [], []>} : vector<8x128xbf16>, vector<128x128xbf16>, vector<8x128xf32> -> vector<8x128xf32>
    %c5_31 = arith.constant 5 : index
    %c0_32 = arith.constant 0 : index
    %45 = vector.load %arg3[%c5_31, %c0_32] : memref<8x128xf32, #tpu.memory_space<vmem>>, vector<1x128xf32>
    %46 = vector.broadcast %45 : vector<1x128xf32> to vector<8x128xf32>
    %47 = arith.addf %44, %46 : vector<8x128xf32>
    %48 = arith.negf %47 : vector<8x128xf32>
    %49 = math.exp %48 : vector<8x128xf32>
    %cst_33 = arith.constant 1.000000e+00 : f32
    %50 = vector.broadcast %cst_33 : f32 to vector<8x128xf32>
    %51 = arith.addf %50, %49 : vector<8x128xf32>
    %52 = arith.divf %50, %51 : vector<8x128xf32>
    %53 = arith.mulf %0, %0 : vector<8x128xf32>
    %cst_34 = arith.constant dense<0.000000e+00> : vector<8x128xf32>
    %54 = tpu.matmul %53, %1, %cst_34 {dimension_numbers = #tpu.dot_dimension_numbers<[1], [0], [0], [1], [0, 0, 1, 1], [], []>} : vector<8x128xf32>, vector<128x128xf32>, vector<8x128xf32> -> vector<8x128xf32>
    %55 = arith.mulf %52, %52 : vector<8x128xf32>
    %cst_35 = arith.constant dense<0.000000e+00> : vector<8x128xf32>
    %56 = tpu.matmul %55, %1, %cst_35 {dimension_numbers = #tpu.dot_dimension_numbers<[1], [0], [0], [1], [0, 0, 1, 1], [], []>} : vector<8x128xf32>, vector<128x128xf32>, vector<8x128xf32> -> vector<8x128xf32>
    %57 = arith.mulf %0, %52 : vector<8x128xf32>
    %cst_36 = arith.constant dense<0.000000e+00> : vector<8x128xf32>
    %58 = tpu.matmul %57, %1, %cst_36 {dimension_numbers = #tpu.dot_dimension_numbers<[1], [0], [0], [1], [0, 0, 1, 1], [], []>} : vector<8x128xf32>, vector<128x128xf32>, vector<8x128xf32> -> vector<8x128xf32>
    %59 = arith.addf %54, %56 : vector<8x128xf32>
    %cst_37 = arith.constant 2.000000e+00 : f32
    %60 = vector.broadcast %cst_37 : f32 to vector<8x128xf32>
    %61 = arith.mulf %60, %58 : vector<8x128xf32>
    %62 = arith.subf %59, %61 : vector<8x128xf32>
    %cst_38 = arith.constant 0.000000e+00 : f32
    %63 = vector.broadcast %cst_38 : f32 to vector<8x128xf32>
    %64 = arith.maximumf %62, %63 : vector<8x128xf32>
    %65 = math.sqrt %64 : vector<8x128xf32>
    %66 = math.rsqrt %54 : vector<8x128xf32>
    %67 = arith.mulf %65, %66 : vector<8x128xf32>
    %cst_39 = arith.constant 1.000000e-16 : f32
    %68 = vector.broadcast %cst_39 : f32 to vector<8x128xf32>
    %69 = arith.maximumf %54, %68 : vector<8x128xf32>
    %70 = math.rsqrt %69 : vector<8x128xf32>
    %71 = arith.mulf %58, %70 : vector<8x128xf32>
    %cst_40 = arith.constant 1.000000e-16 : f32
    %72 = vector.broadcast %cst_40 : f32 to vector<8x128xf32>
    %73 = arith.maximumf %56, %72 : vector<8x128xf32>
    %74 = math.rsqrt %73 : vector<8x128xf32>
    %75 = arith.mulf %71, %74 : vector<8x128xf32>
    %76 = tpu.iota {dimensions = array<i32: 1>} : vector<8x128xi32>
    %c31_i32 = arith.constant 31 : i32
    %77 = vector.broadcast %c31_i32 : i32 to vector<8x128xi32>
    %78 = arith.andi %76, %77 : vector<8x128xi32>
    %c8_i32 = arith.constant 8 : i32
    %79 = vector.broadcast %c8_i32 : i32 to vector<8x128xi32>
    %80 = arith.cmpi eq, %78, %79 : vector<8x128xi32>
    %cst_41 = arith.constant 0.000000e+00 : f32
    %81 = vector.broadcast %cst_41 : f32 to vector<8x128xf32>
    %82 = arith.select %80, %67, %81 : vector<8x128xi1>, vector<8x128xf32>
    %83 = arith.addf %24, %82 : vector<8x128xf32>
    %c9_i32 = arith.constant 9 : i32
    %84 = vector.broadcast %c9_i32 : i32 to vector<8x128xi32>
    %85 = arith.cmpi eq, %78, %84 : vector<8x128xi32>
    %cst_42 = arith.constant 0.000000e+00 : f32
    %86 = vector.broadcast %cst_42 : f32 to vector<8x128xf32>
    %87 = arith.select %85, %75, %86 : vector<8x128xi1>, vector<8x128xf32>
    %88 = arith.addf %83, %87 : vector<8x128xf32>
    %89 = arith.truncf %88 : vector<8x128xf32> to vector<8x128xbf16>
    %c6 = arith.constant 6 : index
    %c0_43 = arith.constant 0 : index
    %c0_44 = arith.constant 0 : index
    %90 = vector.load %arg2[%c6, %c0_43, %c0_44] : memref<8x128x128xbf16, #tpu.memory_space<vmem>>, vector<1x128x128xbf16>
    %91 = vector.shape_cast %90 : vector<1x128x128xbf16> to vector<128x128xbf16>
    %cst_45 = arith.constant dense<0.000000e+00> : vector<8x128xf32>
    %92 = tpu.matmul %89, %91, %cst_45 {dimension_numbers = #tpu.dot_dimension_numbers<[1], [0], [0], [1], [0, 0, 1, 1], [], []>} : vector<8x128xbf16>, vector<128x128xbf16>, vector<8x128xf32> -> vector<8x128xf32>
    %c6_46 = arith.constant 6 : index
    %c0_47 = arith.constant 0 : index
    %93 = vector.load %arg3[%c6_46, %c0_47] : memref<8x128xf32, #tpu.memory_space<vmem>>, vector<1x128xf32>
    %94 = vector.broadcast %93 : vector<1x128xf32> to vector<8x128xf32>
    %95 = arith.addf %92, %94 : vector<8x128xf32>
    %96 = math.tanh %95 : vector<8x128xf32>
    %97 = arith.truncf %96 : vector<8x128xf32> to vector<8x128xbf16>
    %c7 = arith.constant 7 : index
    %c0_48 = arith.constant 0 : index
    %c0_49 = arith.constant 0 : index
    %98 = vector.load %arg2[%c7, %c0_48, %c0_49] : memref<8x128x128xbf16, #tpu.memory_space<vmem>>, vector<1x128x128xbf16>
    %99 = vector.shape_cast %98 : vector<1x128x128xbf16> to vector<128x128xbf16>
    %cst_50 = arith.constant dense<0.000000e+00> : vector<8x128xf32>
    %100 = tpu.matmul %97, %99, %cst_50 {dimension_numbers = #tpu.dot_dimension_numbers<[1], [0], [0], [1], [0, 0, 1, 1], [], []>} : vector<8x128xbf16>, vector<128x128xbf16>, vector<8x128xf32> -> vector<8x128xf32>
    %c7_51 = arith.constant 7 : index
    %c0_52 = arith.constant 0 : index
    %101 = vector.load %arg3[%c7_51, %c0_52] : memref<8x128xf32, #tpu.memory_space<vmem>>, vector<1x128xf32>
    %102 = vector.broadcast %101 : vector<1x128xf32> to vector<8x128xf32>
    %103 = arith.addf %100, %102 : vector<8x128xf32>
    %cst_53 = arith.constant dense<0xFF800000> : vector<8xf32>
    %104 = vector.multi_reduction <maximumf>, %103, %cst_53 [1] : vector<8x128xf32> to vector<8xf32>
    %105 = vector.shape_cast %104 : vector<8xf32> to vector<8x1xf32>
    %106 = vector.broadcast %105 : vector<8x1xf32> to vector<8x128xf32>
    %107 = arith.subf %103, %106 : vector<8x128xf32>
    %108 = math.exp %107 : vector<8x128xf32>
    %cst_54 = arith.constant dense<0.000000e+00> : vector<8x128xf32>
    %109 = tpu.matmul %108, %1, %cst_54 {dimension_numbers = #tpu.dot_dimension_numbers<[1], [0], [0], [1], [0, 0, 1, 1], [], []>} : vector<8x128xf32>, vector<128x128xf32>, vector<8x128xf32> -> vector<8x128xf32>
    %110 = arith.divf %108, %109 : vector<8x128xf32>
    %c0_55 = arith.constant 0 : index
    %c0_56 = arith.constant 0 : index
    %111 = vector.load %arg5[%c0_55, %c0_56] : memref<8x384xf32, #tpu.memory_space<vmem>>, vector<8x128xf32>
    tpu.vector_store %arg5[%c0_55, %c0_56], %88 {strides = array<i32>} : memref<8x384xf32, #tpu.memory_space<vmem>>, vector<8x128xf32>,
    %c0_57 = arith.constant 0 : index
    %c128 = arith.constant 128 : index
    %112 = vector.load %arg5[%c0_57, %c128] : memref<8x384xf32, #tpu.memory_space<vmem>>, vector<8x128xf32>
    tpu.vector_store %arg5[%c0_57, %c128], %52 {strides = array<i32>} : memref<8x384xf32, #tpu.memory_space<vmem>>, vector<8x128xf32>,
    %c0_58 = arith.constant 0 : index
    %c256 = arith.constant 256 : index
    %113 = vector.load %arg5[%c0_58, %c256] : memref<8x384xf32, #tpu.memory_space<vmem>>, vector<8x128xf32>
    tpu.vector_store %arg5[%c0_58, %c256], %110 {strides = array<i32>} : memref<8x384xf32, #tpu.memory_space<vmem>>, vector<8x128xf32>,
    return
  }
  func.func @transform_0(%arg0: i32) -> (i32, i32) {
    %c0_i32 = arith.constant 0 : i32
    %c0_i32_0 = arith.constant 0 : i32
    return %arg0, %c0_i32 : i32, i32
  }
  func.func @transform_1(%arg0: i32) -> (i32, i32, i32) {
    %c0_i32 = arith.constant 0 : i32
    %c0_i32_0 = arith.constant 0 : i32
    %c0_i32_1 = arith.constant 0 : i32
    %c0_i32_2 = arith.constant 0 : i32
    return %c0_i32, %c0_i32_0, %c0_i32_1 : i32, i32, i32
  }
  func.func @transform_2(%arg0: i32) -> (i32, i32) {
    %c0_i32 = arith.constant 0 : i32
    %c0_i32_0 = arith.constant 0 : i32
    %c0_i32_1 = arith.constant 0 : i32
    return %c0_i32, %c0_i32_0 : i32, i32
  }
  func.func @transform_3(%arg0: i32) -> (i32, i32) {
    %c0_i32 = arith.constant 0 : i32
    %c0_i32_0 = arith.constant 0 : i32
    %c0_i32_1 = arith.constant 0 : i32
    return %c0_i32, %c0_i32_0 : i32, i32
  }
  func.func @transform_4(%arg0: i32) -> (i32, i32) {
    %c0_i32 = arith.constant 0 : i32
    %c0_i32_0 = arith.constant 0 : i32
    return %arg0, %c0_i32 : i32, i32
  }
}

</mosaic_0001>

<llo_original>
// kernel: dagmm_forward.1
$region0: #{dagmm_forward.1}
  #allocation0 [shape = 'u32[]', space=smem, size = 0x4, offset = 0x4, fixed_abs, tag = 'smem constant byte address 0x4 - core index']
  #allocation1 [shape = 'u32[72,128]{1,0:T(1,128)}', space=vmem, size = 0x9000, scoped, tag = 'internal scratch']
  %s0 = inlined_call_operand.vmem [shape: f32[8,128], index: 0, kind: input, shape index: {}]
  %s1 = inlined_call_operand.vmem [shape: bf16[8,128,128], index: 1, kind: input, shape index: {}]
  %s2 = inlined_call_operand.vmem [shape: f32[8,128], index: 2, kind: input, shape index: {}]
  %s3 = inlined_call_operand.vmem [shape: f32[128,128], index: 3, kind: input, shape index: {}]
  %s4 = inlined_call_operand.vmem [shape: f32[8,384], index: 4, kind: output, shape index: {}]
  %s5 = sld [smem:[#allocation0]]
  $region26: #{dagmm_forward.1} parent=0
    _
  %s7 = ssub.s32 1, %s5
  %s8 = scalar_select 0, %s7, %s5
  // Predicated region
  $region2: #{dagmm_forward.1} parent=0 // pred_check
    _
  $region3: #{dagmm_forward.1} parent=0 // pred_check_branch
    %10 = sbr.rel (0) target = $region5
  $region4: #{dagmm_forward.1} parent=0 // pred_region
    _
  $region5: #{dagmm_forward.1} parent=0 // pred_fallthru
    _
  // Predicated region
  $region6: #{dagmm_forward.1} parent=0 // pred_check
    _
  $region7: #{dagmm_forward.1} parent=0 // pred_check_branch
    %12 = sbr.rel (0) target = $region9
  $region8: #{dagmm_forward.1} parent=0 // pred_region
    _
  $region9: #{dagmm_forward.1} parent=0 // pred_fallthru
    _
  // Predicated region
  $region10: #{dagmm_forward.1} parent=0 // pred_check
    _
  $region11: #{dagmm_forward.1} parent=0 // pred_check_branch
    %14 = sbr.rel (0) target = $region13
  $region12: #{dagmm_forward.1} parent=0 // pred_region
    _
  $region13: #{dagmm_forward.1} parent=0 // pred_fallthru
    _
  // Predicated region
  $region14: #{dagmm_forward.1} parent=0 // pred_check
    _
  $region15: #{dagmm_forward.1} parent=0 // pred_check_branch
    %16 = sbr.rel (0) target = $region17
  $region16: #{dagmm_forward.1} parent=0 // pred_region
    _
  $region17: #{dagmm_forward.1} parent=0 // pred_fallthru
    _
  %v17 = vld [vmem:[%s0] sm:$0xff]
  %v18 = vld [vmem:[%s3] sm:$0xff]
  %v19 = vld [vmem:[%s3 + $0x8] sm:$0xff]
  %v20 = vld [vmem:[%s3 + $0x10] sm:$0xff]
  %v21 = vld [vmem:[%s3 + $0x18] sm:$0xff]
  %v22 = vld [vmem:[%s3 + $0x20] sm:$0xff]
  %v23 = vld [vmem:[%s3 + $0x28] sm:$0xff]
  %v24 = vld [vmem:[%s3 + $0x30] sm:$0xff]
  %v25 = vld [vmem:[%s3 + $0x38] sm:$0xff]
  %v26 = vld [vmem:[%s3 + $0x40] sm:$0xff]
  %v27 = vld [vmem:[%s3 + $0x48] sm:$0xff]
  %v28 = vld [vmem:[%s3 + $0x50] sm:$0xff]
  %v29 = vld [vmem:[%s3 + $0x58] sm:$0xff]
  %v30 = vld [vmem:[%s3 + $0x60] sm:$0xff]
  %v31 = vld [vmem:[%s3 + $0x68] sm:$0xff]
  %v32 = vld [vmem:[%s3 + $0x70] sm:$0xff]
  %v33 = vld [vmem:[%s3 + $0x78] sm:$0xff]
  %v34 = vpack.c.bf16 %v17, %v17
  %v35 = vld [vmem:[%s1] sm:$0xf]
  %v36 = vld [vmem:[%s1 + $0x4] sm:$0xf]
  %v37 = vld [vmem:[%s1 + $0x8] sm:$0xf]
  %v38 = vld [vmem:[%s1 + $0xc] sm:$0xf]
  %v39 = vld [vmem:[%s1 + $0x10] sm:$0xf]
  %v40 = vld [vmem:[%s1 + $0x14] sm:$0xf]
  %v41 = vld [vmem:[%s1 + $0x18] sm:$0xf]
  %v42 = vld [vmem:[%s1 + $0x1c] sm:$0xf]
  %v43 = vld [vmem:[%s1 + $0x20] sm:$0xf]
  %v44 = vld [vmem:[%s1 + $0x24] sm:$0xf]
  %v45 = vld [vmem:[%s1 + $0x28] sm:$0xf]
  %v46 = vld [vmem:[%s1 + $0x2c] sm:$0xf]
  %v47 = vld [vmem:[%s1 + $0x30] sm:$0xf]
  %v48 = vld [vmem:[%s1 + $0x34] sm:$0xf]
  %v49 = vld [vmem:[%s1 + $0x38] sm:$0xf]
  %v50 = vld [vmem:[%s1 + $0x3c] sm:$0xf]
  %v51 = vld [vmem:[%s2] sm:$0x1]
  %v52 = vperm.slane %v51, 0
  %v69 = vunpack.c.l.b16 %v35
  %v70 = vunpack.c.l.b16 %v36
  %v71 = vunpack.c.l.b16 %v37
  %v72 = vunpack.c.l.b16 %v38
  %v73 = vunpack.c.l.b16 %v39
  %v74 = vunpack.c.l.b16 %v40
  %v75 = vunpack.c.l.b16 %v41
  %v76 = vunpack.c.l.b16 %v42
  %v77 = vunpack.c.l.b16 %v43
  %v78 = vunpack.c.l.b16 %v44
  %v79 = vunpack.c.l.b16 %v45
  %v80 = vunpack.c.l.b16 %v46
  %v81 = vunpack.c.l.b16 %v47
  %v82 = vunpack.c.l.b16 %v48
  %v83 = vunpack.c.l.b16 %v49
  %v84 = vunpack.c.l.b16 %v50
  %v85 = vpack.c.b16 %v70, %v69
  %v86 = vpack.c.b16 %v72, %v71
  %v87 = vpack.c.b16 %v74, %v73
  %v88 = vpack.c.b16 %v76, %v75
  %v89 = vpack.c.b16 %v78, %v77
  %v90 = vpack.c.b16 %v80, %v79
  %v91 = vpack.c.b16 %v82, %v81
  %v92 = vpack.c.b16 %v84, %v83
  %101 = vmatpush.bf16.msra.mxu0 %v92
  %102 = vmatpush.bf16.msra.mxu0 %v91
  %103 = vmatpush.bf16.msra.mxu0 %v90
  %104 = vmatpush.bf16.msra.mxu0 %v89
  %105 = vmatpush.bf16.msra.mxu0 %v88
  %106 = vmatpush.bf16.msra.mxu0 %v87
  %107 = vmatpush.bf16.msra.mxu0 %v86
  %108 = vmatpush.bf16.msra.mxu0 %v85
  %109 = vmatmul.bf16.gmra.mxu0 %v34
  %v110 = vpop.f32.mrf.mxu0
  %v111 = vadd.f32 %v52, %v110
  %v112 = vpop.f32.mrf.mxu0
  %113 = vdwg.mxu0
  %v114 = vtanh.pop %v111
  %v115 = vpack.c.bf16 %v114, %v114
  %s116 = scalar_lea.vmem %s1, 64
  %v117 = vld [vmem:[%s116] sm:$0xf]
  %v118 = vld [vmem:[%s116 + $0x4] sm:$0xf]
  %v119 = vld [vmem:[%s116 + $0x8] sm:$0xf]
  %v120 = vld [vmem:[%s116 + $0xc] sm:$0xf]
  %v121 = vld [vmem:[%s116 + $0x10] sm:$0xf]
  %v122 = vld [vmem:[%s116 + $0x14] sm:$0xf]
  %v123 = vld [vmem:[%s116 + $0x18] sm:$0xf]
  %v124 = vld [vmem:[%s116 + $0x1c] sm:$0xf]
  %v125 = vld [vmem:[%s116 + $0x20] sm:$0xf]
  %v126 = vld [vmem:[%s116 + $0x24] sm:$0xf]
  %v127 = vld [vmem:[%s116 + $0x28] sm:$0xf]
  %v128 = vld [vmem:[%s116 + $0x2c] sm:$0xf]
  %v129 = vld [vmem:[%s116 + $0x30] sm:$0xf]
  %v130 = vld [vmem:[%s116 + $0x34] sm:$0xf]
  %v131 = vld [vmem:[%s116 + $0x38] sm:$0xf]
  %v132 = vld [vmem:[%s116 + $0x3c] sm:$0xf]
  %v133 = vld [vmem:[%s2 + $0x1] sm:$0x1]
  %v134 = vperm.slane %v133, 0
  %v151 = vunpack.c.l.b16 %v117
  %v152 = vunpack.c.l.b16 %v118
  %v153 = vunpack.c.l.b16 %v119
  %v154 = vunpack.c.l.b16 %v120
  %v155 = vunpack.c.l.b16 %v121
  %v156 = vunpack.c.l.b16 %v122
  %v157 = vunpack.c.l.b16 %v123
  %v158 = vunpack.c.l.b16 %v124
  %v159 = vunpack.c.l.b16 %v125
  %v160 = vunpack.c.l.b16 %v126
  %v161 = vunpack.c.l.b16 %v127
  %v162 = vunpack.c.l.b16 %v128
  %v163 = vunpack.c.l.b16 %v129
  %v164 = vunpack.c.l.b16 %v130
  %v165 = vunpack.c.l.b16 %v131
  %v166 = vunpack.c.l.b16 %v132
  %v167 = vpack.c.b16 %v152, %v151
  %v168 = vpack.c.b16 %v154, %v153
  %v169 = vpack.c.b16 %v156, %v155
  %v170 = vpack.c.b16 %v158, %v157
  %v171 = vpack.c.b16 %v160, %v159
  %v172 = vpack.c.b16 %v162, %v161
  %v173 = vpack.c.b16 %v164, %v163
  %v174 = vpack.c.b16 %v166, %v165
  %183 = vmatpush.bf16.msra.mxu0 %v174
  %184 = vmatpush.bf16.msra.mxu0 %v173
  %185 = vmatpush.bf16.msra.mxu0 %v172
  %186 = vmatpush.bf16.msra.mxu0 %v171
  %187 = vmatpush.bf16.msra.mxu0 %v170
  %188 = vmatpush.bf16.msra.mxu0 %v169
  %189 = vmatpush.bf16.msra.mxu0 %v168
  %190 = vmatpush.bf16.msra.mxu0 %v167
  %191 = vmatmul.bf16.gmra.mxu0 %v115
  %v192 = vpop.f32.mrf.mxu0
  %v193 = vadd.f32 %v134, %v192
  %v194 = vpop.f32.mrf.mxu0
  %195 = vdwg.mxu0
  %v196 = vtanh.pop %v193
  %v197 = vpack.c.bf16 %v196, %v196
  %s198 = scalar_lea.vmem %s1, 128
  %v199 = vld [vmem:[%s198] sm:$0xf]
  %v200 = vld [vmem:[%s198 + $0x4] sm:$0xf]
  %v201 = vld [vmem:[%s198 + $0x8] sm:$0xf]
  %v202 = vld [vmem:[%s198 + $0xc] sm:$0xf]
  %v203 = vld [vmem:[%s198 + $0x10] sm:$0xf]
  %v204 = vld [vmem:[%s198 + $0x14] sm:$0xf]
  %v205 = vld [vmem:[%s198 + $0x18] sm:$0xf]
  %v206 = vld [vmem:[%s198 + $0x1c] sm:$0xf]
  %v207 = vld [vmem:[%s198 + $0x20] sm:$0xf]
  %v208 = vld [vmem:[%s198 + $0x24] sm:$0xf]
  %v209 = vld [vmem:[%s198 + $0x28] sm:$0xf]
  %v210 = vld [vmem:[%s198 + $0x2c] sm:$0xf]
  %v211 = vld [vmem:[%s198 + $0x30] sm:$0xf]
  %v212 = vld [vmem:[%s198 + $0x34] sm:$0xf]
  %v213 = vld [vmem:[%s198 + $0x38] sm:$0xf]
  %v214 = vld [vmem:[%s198 + $0x3c] sm:$0xf]
  %v215 = vld [vmem:[%s2 + $0x2] sm:$0x1]
  %v216 = vperm.slane %v215, 0
  %v233 = vunpack.c.l.b16 %v199
  %v234 = vunpack.c.l.b16 %v200
  %v235 = vunpack.c.l.b16 %v201
  %v236 = vunpack.c.l.b16 %v202
  %v237 = vunpack.c.l.b16 %v203
  %v238 = vunpack.c.l.b16 %v204
  %v239 = vunpack.c.l.b16 %v205
  %v240 = vunpack.c.l.b16 %v206
  %v241 = vunpack.c.l.b16 %v207
  %v242 = vunpack.c.l.b16 %v208
  %v243 = vunpack.c.l.b16 %v209
  %v244 = vunpack.c.l.b16 %v210
  %v245 = vunpack.c.l.b16 %v211
  %v246 = vunpack.c.l.b16 %v212
  %v247 = vunpack.c.l.b16 %v213
  %v248 = vunpack.c.l.b16 %v214
  %v249 = vpack.c.b16 %v234, %v233
  %v250 = vpack.c.b16 %v236, %v235
  %v251 = vpack.c.b16 %v238, %v237
  %v252 = vpack.c.b16 %v240, %v239
  %v253 = vpack.c.b16 %v242, %v241
  %v254 = vpack.c.b16 %v244, %v243
  %v255 = vpack.c.b16 %v246, %v245
  %v256 = vpack.c.b16 %v248, %v247
  %265 = vmatpush.bf16.msra.mxu0 %v256
  %266 = vmatpush.bf16.msra.mxu0 %v255
  %267 = vmatpush.bf16.msra.mxu0 %v254
  %268 = vmatpush.bf16.msra.mxu0 %v253
  %269 = vmatpush.bf16.msra.mxu0 %v252
  %270 = vmatpush.bf16.msra.mxu0 %v251
  %271 = vmatpush.bf16.msra.mxu0 %v250
  %272 = vmatpush.bf16.msra.mxu0 %v249
  %273 = vmatmul.bf16.gmra.mxu0 %v197
  %v274 = vpop.f32.mrf.mxu0
  %v275 = vadd.f32 %v216, %v274
  %v276 = vpop.f32.mrf.mxu0
  %277 = vdwg.mxu0
  %v278 = vpack.c.bf16 %v275, %v275
  %s279 = scalar_lea.vmem %s1, 192
  %v280 = vld [vmem:[%s279] sm:$0xf]
  %v281 = vld [vmem:[%s279 + $0x4] sm:$0xf]
  %v282 = vld [vmem:[%s279 + $0x8] sm:$0xf]
  %v283 = vld [vmem:[%s279 + $0xc] sm:$0xf]
  %v284 = vld [vmem:[%s279 + $0x10] sm:$0xf]
  %v285 = vld [vmem:[%s279 + $0x14] sm:$0xf]
  %v286 = vld [vmem:[%s279 + $0x18] sm:$0xf]
  %v287 = vld [vmem:[%s279 + $0x1c] sm:$0xf]
  %v288 = vld [vmem:[%s279 + $0x20] sm:$0xf]
  %v289 = vld [vmem:[%s279 + $0x24] sm:$0xf]
  %v290 = vld [vmem:[%s279 + $0x28] sm:$0xf]
  %v291 = vld [vmem:[%s279 + $0x2c] sm:$0xf]
  %v292 = vld [vmem:[%s279 + $0x30] sm:$0xf]
  %v293 = vld [vmem:[%s279 + $0x34] sm:$0xf]
  %v294 = vld [vmem:[%s279 + $0x38] sm:$0xf]
  %v295 = vld [vmem:[%s279 + $0x3c] sm:$0xf]
  %v296 = vld [vmem:[%s2 + $0x3] sm:$0x1]
  %v297 = vperm.slane %v296, 0
  %v314 = vunpack.c.l.b16 %v280
  %v315 = vunpack.c.l.b16 %v281
  %v316 = vunpack.c.l.b16 %v282
  %v317 = vunpack.c.l.b16 %v283
  %v318 = vunpack.c.l.b16 %v284
  %v319 = vunpack.c.l.b16 %v285
  %v320 = vunpack.c.l.b16 %v286
  %v321 = vunpack.c.l.b16 %v287
  %v322 = vunpack.c.l.b16 %v288
  %v323 = vunpack.c.l.b16 %v289
  %v324 = vunpack.c.l.b16 %v290
  %v325 = vunpack.c.l.b16 %v291
  %v326 = vunpack.c.l.b16 %v292
  %v327 = vunpack.c.l.b16 %v293
  %v328 = vunpack.c.l.b16 %v294
  %v329 = vunpack.c.l.b16 %v295
  %v330 = vpack.c.b16 %v315, %v314
  %v331 = vpack.c.b16 %v317, %v316
  %v332 = vpack.c.b16 %v319, %v318
  %v333 = vpack.c.b16 %v321, %v320
  %v334 = vpack.c.b16 %v323, %v322
  %v335 = vpack.c.b16 %v325, %v324
  %v336 = vpack.c.b16 %v327, %v326
  %v337 = vpack.c.b16 %v329, %v328
  %346 = vmatpush.bf16.msra.mxu0 %v337
  %347 = vmatpush.bf16.msra.mxu0 %v336
  %348 = vmatpush.bf16.msra.mxu0 %v335
  %349 = vmatpush.bf16.msra.mxu0 %v334
  %350 = vmatpush.bf16.msra.mxu0 %v333
  %351 = vmatpush.bf16.msra.mxu0 %v332
  %352 = vmatpush.bf16.msra.mxu0 %v331
  %353 = vmatpush.bf16.msra.mxu0 %v330
  %354 = vmatmul.bf16.gmra.mxu0 %v278
  %v355 = vpop.f32.mrf.mxu0
  %v356 = vadd.f32 %v297, %v355
  %v357 = vpop.f32.mrf.mxu0
  %358 = vdwg.mxu0
  %v359 = vtanh.pop %v356
  %v360 = vpack.c.bf16 %v359, %v359
  %s361 = scalar_lea.vmem %s1, 256
  %v362 = vld [vmem:[%s361] sm:$0xf]
  %v363 = vld [vmem:[%s361 + $0x4] sm:$0xf]
  %v364 = vld [vmem:[%s361 + $0x8] sm:$0xf]
  %v365 = vld [vmem:[%s361 + $0xc] sm:$0xf]
  %v366 = vld [vmem:[%s361 + $0x10] sm:$0xf]
  %v367 = vld [vmem:[%s361 + $0x14] sm:$0xf]
  %v368 = vld [vmem:[%s361 + $0x18] sm:$0xf]
  %v369 = vld [vmem:[%s361 + $0x1c] sm:$0xf]
  %v370 = vld [vmem:[%s361 + $0x20] sm:$0xf]
  %v371 = vld [vmem:[%s361 + $0x24] sm:$0xf]
  %v372 = vld [vmem:[%s361 + $0x28] sm:$0xf]
  %v373 = vld [vmem:[%s361 + $0x2c] sm:$0xf]
  %v374 = vld [vmem:[%s361 + $0x30] sm:$0xf]
  %v375 = vld [vmem:[%s361 + $0x34] sm:$0xf]
  %v376 = vld [vmem:[%s361 + $0x38] sm:$0xf]
  %v377 = vld [vmem:[%s361 + $0x3c] sm:$0xf]
  %v378 = vld [vmem:[%s2 + $0x4] sm:$0x1]
  %v379 = vperm.slane %v378, 0
  %v396 = vunpack.c.l.b16 %v362
  %v397 = vunpack.c.l.b16 %v363
  %v398 = vunpack.c.l.b16 %v364
  %v399 = vunpack.c.l.b16 %v365
  %v400 = vunpack.c.l.b16 %v366
  %v401 = vunpack.c.l.b16 %v367
  %v402 = vunpack.c.l.b16 %v368
  %v403 = vunpack.c.l.b16 %v369
  %v404 = vunpack.c.l.b16 %v370
  %v405 = vunpack.c.l.b16 %v371
  %v406 = vunpack.c.l.b16 %v372
  %v407 = vunpack.c.l.b16 %v373
  %v408 = vunpack.c.l.b16 %v374
  %v409 = vunpack.c.l.b16 %v375
  %v410 = vunpack.c.l.b16 %v376
  %v411 = vunpack.c.l.b16 %v377
  %v412 = vpack.c.b16 %v397, %v396
  %v413 = vpack.c.b16 %v399, %v398
  %v414 = vpack.c.b16 %v401, %v400
  %v415 = vpack.c.b16 %v403, %v402
  %v416 = vpack.c.b16 %v405, %v404
  %v417 = vpack.c.b16 %v407, %v406
  %v418 = vpack.c.b16 %v409, %v408
  %v419 = vpack.c.b16 %v411, %v410
  %428 = vmatpush.bf16.msra.mxu0 %v419
  %429 = vmatpush.bf16.msra.mxu0 %v418
  %430 = vmatpush.bf16.msra.mxu0 %v417
  %431 = vmatpush.bf16.msra.mxu0 %v416
  %432 = vmatpush.bf16.msra.mxu0 %v415
  %433 = vmatpush.bf16.msra.mxu0 %v414
  %434 = vmatpush.bf16.msra.mxu0 %v413
  %435 = vmatpush.bf16.msra.mxu0 %v412
  %436 = vmatmul.bf16.gmra.mxu0 %v360
  %v437 = vpop.f32.mrf.mxu0
  %v438 = vadd.f32 %v379, %v437
  %v439 = vpop.f32.mrf.mxu0
  %440 = vdwg.mxu0
  %v441 = vtanh.pop %v438
  %v442 = vpack.c.bf16 %v441, %v441
  %s443 = scalar_lea.vmem %s1, 320
  %v444 = vld [vmem:[%s443] sm:$0xf]
  %v445 = vld [vmem:[%s443 + $0x4] sm:$0xf]
  %v446 = vld [vmem:[%s443 + $0x8] sm:$0xf]
  %v447 = vld [vmem:[%s443 + $0xc] sm:$0xf]
  %v448 = vld [vmem:[%s443 + $0x10] sm:$0xf]
  %v449 = vld [vmem:[%s443 + $0x14] sm:$0xf]
  %v450 = vld [vmem:[%s443 + $0x18] sm:$0xf]
  %v451 = vld [vmem:[%s443 + $0x1c] sm:$0xf]
  %v452 = vld [vmem:[%s443 + $0x20] sm:$0xf]
  %v453 = vld [vmem:[%s443 + $0x24] sm:$0xf]
  %v454 = vld [vmem:[%s443 + $0x28] sm:$0xf]
  %v455 = vld [vmem:[%s443 + $0x2c] sm:$0xf]
  %v456 = vld [vmem:[%s443 + $0x30] sm:$0xf]
  %v457 = vld [vmem:[%s443 + $0x34] sm:$0xf]
  %v458 = vld [vmem:[%s443 + $0x38] sm:$0xf]
  %v459 = vld [vmem:[%s443 + $0x3c] sm:$0xf]
  %v460 = vld [vmem:[%s2 + $0x5] sm:$0x1]
  %v461 = vperm.slane %v460, 0
  %v478 = vunpack.c.l.b16 %v444
  %v479 = vunpack.c.l.b16 %v445
  %v480 = vunpack.c.l.b16 %v446
  %v481 = vunpack.c.l.b16 %v447
  %v482 = vunpack.c.l.b16 %v448
  %v483 = vunpack.c.l.b16 %v449
  %v484 = vunpack.c.l.b16 %v450
  %v485 = vunpack.c.l.b16 %v451
  %v486 = vunpack.c.l.b16 %v452
  %v487 = vunpack.c.l.b16 %v453
  %v488 = vunpack.c.l.b16 %v454
  %v489 = vunpack.c.l.b16 %v455
  %v490 = vunpack.c.l.b16 %v456
  %v491 = vunpack.c.l.b16 %v457
  %v492 = vunpack.c.l.b16 %v458
  %v493 = vunpack.c.l.b16 %v459
  %v494 = vpack.c.b16 %v479, %v478
  %v495 = vpack.c.b16 %v481, %v480
  %v496 = vpack.c.b16 %v483, %v482
  %v497 = vpack.c.b16 %v485, %v484
  %v498 = vpack.c.b16 %v487, %v486
  %v499 = vpack.c.b16 %v489, %v488
  %v500 = vpack.c.b16 %v491, %v490
  %v501 = vpack.c.b16 %v493, %v492
  %510 = vmatpush.bf16.msra.mxu0 %v501
  %511 = vmatpush.bf16.msra.mxu0 %v500
  %512 = vmatpush.bf16.msra.mxu0 %v499
  %513 = vmatpush.bf16.msra.mxu0 %v498
  %514 = vmatpush.bf16.msra.mxu0 %v497
  %515 = vmatpush.bf16.msra.mxu0 %v496
  %516 = vmatpush.bf16.msra.mxu0 %v495
  %517 = vmatpush.bf16.msra.mxu0 %v494
  %518 = vmatmul.bf16.gmra.mxu0 %v442
  %v519 = vpop.f32.mrf.mxu0
  %v520 = vadd.f32 %v461, %v519
  %v521 = vpop.f32.mrf.mxu0
  %522 = vdwg.mxu0
  %v523 = vxor.u32 %v520, 2147483648
  %v524 = vmul.f32 %v523, 1.442695
  %v525 = vpow.pop %v524
  %v526 = vadd.f32 %v525, 1.0
  %v527 = vrcp.pop %v526
  %v528 = vmul.f32 %v526, %v527
  %v529 = vsub.f32 1.0, %v528
  %v530 = vmul.f32 %v527, %v529
  %v531 = vadd.f32 %v527, %v530
  %vm532 = vweird.f32 %v526
  %vm533 = vweird.f32 %v527
  %vm534 = vmor %vm532, %vm533
  %v535 = vsel %vm534, %v527, %v531
  %v536 = vand.u32 2147483647, %v526
  %vm537 = vcmp.eq.f32.partialorder %v536, 8.507059e+37
  %v538 = vand.u32 %v526, 2147483648
  %v539 = vor.u32 1.1754944e-38, %v538
  %v540 = vsel %vm537, %v539, %v535
  %v541 = vmul.f32 1.0, %v540
  %v542 = vmul.f32 %v17, %v17
  %543 = vmatpush.msra.mxu0 %v33
  %544 = vmatpush.msra.mxu0 %v32
  %545 = vmatpush.msra.mxu0 %v31
  %546 = vmatpush.msra.mxu0 %v30
  %547 = vmatpush.msra.mxu0 %v29
  %548 = vmatpush.msra.mxu0 %v28
  %549 = vmatpush.msra.mxu0 %v27
  %550 = vmatpush.msra.mxu0 %v26
  %551 = vmatpush.msra.mxu0 %v25
  %552 = vmatpush.msra.mxu0 %v24
  %553 = vmatpush.msra.mxu0 %v23
  %554 = vmatpush.msra.mxu0 %v22
  %555 = vmatpush.msra.mxu0 %v21
  %556 = vmatpush.msra.mxu0 %v20
  %557 = vmatpush.msra.mxu0 %v19
  %558 = vmatpush.msra.mxu0 %v18
  %559 = vmatmul.f32.gmra.mxu0 %v542
  %v560 = vpop.f32.mrf.mxu0
  %v561 = vadd.f32 0.0, %v560
  %562 = vdwg.mxu0
  %v563 = vmul.f32 %v541, %v541
  %564 = vmatpush.msra.mxu0 %v33
  %565 = vmatpush.msra.mxu0 %v32
  %566 = vmatpush.msra.mxu0 %v31
  %567 = vmatpush.msra.mxu0 %v30
  %568 = vmatpush.msra.mxu0 %v29
  %569 = vmatpush.msra.mxu0 %v28
  %570 = vmatpush.msra.mxu0 %v27
  %571 = vmatpush.msra.mxu0 %v26
  %572 = vmatpush.msra.mxu0 %v25
  %573 = vmatpush.msra.mxu0 %v24
  %574 = vmatpush.msra.mxu0 %v23
  %575 = vmatpush.msra.mxu0 %v22
  %576 = vmatpush.msra.mxu0 %v21
  %577 = vmatpush.msra.mxu0 %v20
  %578 = vmatpush.msra.mxu0 %v19
  %579 = vmatpush.msra.mxu0 %v18
  %580 = vmatmul.f32.gmra.mxu0 %v563
  %v581 = vpop.f32.mrf.mxu0
  %v582 = vadd.f32 0.0, %v581
  %583 = vdwg.mxu0
  %v584 = vmul.f32 %v17, %v541
  %585 = vmatpush.msra.mxu0 %v33
  %586 = vmatpush.msra.mxu0 %v32
  %587 = vmatpush.msra.mxu0 %v31
  %588 = vmatpush.msra.mxu0 %v30
  %589 = vmatpush.msra.mxu0 %v29
  %590 = vmatpush.msra.mxu0 %v28
  %591 = vmatpush.msra.mxu0 %v27
  %592 = vmatpush.msra.mxu0 %v26
  %593 = vmatpush.msra.mxu0 %v25
  %594 = vmatpush.msra.mxu0 %v24
  %595 = vmatpush.msra.mxu0 %v23
  %596 = vmatpush.msra.mxu0 %v22
  %597 = vmatpush.msra.mxu0 %v21
  %598 = vmatpush.msra.mxu0 %v20
  %599 = vmatpush.msra.mxu0 %v19
  %600 = vmatpush.msra.mxu0 %v18
  %601 = vmatmul.f32.gmra.mxu0 %v584
  %v602 = vpop.f32.mrf.mxu0
  %v603 = vadd.f32 0.0, %v602
  %604 = vdwg.mxu0
  %v605 = vadd.f32 %v561, %v582
  %v606 = vmul.f32 %v603, 2.0
  %v607 = vsub.f32 %v605, %v606
  %v608 = vmax.f32 %v607, 0.0
  %v609 = vrsqrt.pop %v608
  %v610 = vmul.f32 %v609, %v608
  %v611 = vmul.f32 %v610, %v609
  %v612 = vmul.f32 0.5, %v611
  %v613 = vsub.f32 1.5, %v612
  %v614 = vmul.f32 %v609, %v613
  %v615 = vmul.f32 %v608, %v614
  %vm616 = vcmp.eq.f32.partialorder %v608, inf
  %v617 = vsel %vm616, %v608, %v615
  %vm618 = vcmp.eq.f32.partialorder %v608, 0.0
  %v619 = vand.u32 %v608, 2147483648
  %v620 = vsel %vm618, %v619, %v617
  %v621 = vrsqrt.pop %v561
  %v622 = vmul.f32 %v621, %v561
  %v623 = vmul.f32 %v622, %v621
  %v624 = vmul.f32 0.5, %v623
  %v625 = vsub.f32 1.5, %v624
  %v626 = vmul.f32 %v621, %v625
  %vm627 = vweird.f32 %v561
  %vm628 = vweird.f32 %v621
  %vm629 = vmor %vm627, %vm628
  %v630 = vsel %vm629, %v621, %v626
  %v631 = vmul.f32 %v620, %v630
  %v632 = vmax.f32 %v561, 1e-16
  %v633 = vrsqrt.pop %v632
  %v634 = vmul.f32 %v633, %v632
  %v635 = vmul.f32 %v634, %v633
  %v636 = vmul.f32 0.5, %v635
  %v637 = vsub.f32 1.5, %v636
  %v638 = vmul.f32 %v633, %v637
  %vm639 = vweird.f32 %v632
  %vm640 = vweird.f32 %v633
  %vm641 = vmor %vm639, %vm640
  %v642 = vsel %vm641, %v633, %v638
  %v643 = vmul.f32 %v603, %v642
  %v644 = vmax.f32 %v582, 1e-16
  %v645 = vrsqrt.pop %v644
  %v646 = vmul.f32 %v645, %v644
  %v647 = vmul.f32 %v646, %v645
  %v648 = vmul.f32 0.5, %v647
  %v649 = vsub.f32 1.5, %v648
  %v650 = vmul.f32 %v645, %v649
  %vm651 = vweird.f32 %v644
  %vm652 = vweird.f32 %v645
  %vm653 = vmor %vm651, %vm652
  %v654 = vsel %vm653, %v645, %v650
  %v655 = vmul.f32 %v643, %v654
  %v656 = vlaneseq
  %v657 = vand.u32 %v656, 127
  %v658 = vand.u32 %v657, 31
  %vm659 = vcmp.eq.s32.totalorder %v658, 8
  %v660 = vsel %vm659, %v631, 0.0
  %v661 = vadd.f32 %v275, %v660
  %vm662 = vcmp.eq.s32.totalorder %v658, 9
  %v663 = vsel %vm662, %v655, 0.0
  %v664 = vadd.f32 %v661, %v663
  %v665 = vpack.c.bf16 %v664, %v664
  %s666 = scalar_lea.vmem %s1, 384
  %v667 = vld [vmem:[%s666] sm:$0xf]
  %v668 = vld [vmem:[%s666 + $0x4] sm:$0xf]
  %v669 = vld [vmem:[%s666 + $0x8] sm:$0xf]
  %v670 = vld [vmem:[%s666 + $0xc] sm:$0xf]
  %v671 = vld [vmem:[%s666 + $0x10] sm:$0xf]
  %v672 = vld [vmem:[%s666 + $0x14] sm:$0xf]
  %v673 = vld [vmem:[%s666 + $0x18] sm:$0xf]
  %v674 = vld [vmem:[%s666 + $0x1c] sm:$0xf]
  %v675 = vld [vmem:[%s666 + $0x20] sm:$0xf]
  %v676 = vld [vmem:[%s666 + $0x24] sm:$0xf]
  %v677 = vld [vmem:[%s666 + $0x28] sm:$0xf]
  %v678 = vld [vmem:[%s666 + $0x2c] sm:$0xf]
  %v679 = vld [vmem:[%s666 + $0x30] sm:$0xf]
  %v680 = vld [vmem:[%s666 + $0x34] sm:$0xf]
  %v681 = vld [vmem:[%s666 + $0x38] sm:$0xf]
  %v682 = vld [vmem:[%s666 + $0x3c] sm:$0xf]
  %v683 = vld [vmem:[%s2 + $0x6] sm:$0x1]
  %v684 = vperm.slane %v683, 0
  %v701 = vunpack.c.l.b16 %v667
  %v702 = vunpack.c.l.b16 %v668
  %v703 = vunpack.c.l.b16 %v669
  %v704 = vunpack.c.l.b16 %v670
  %v705 = vunpack.c.l.b16 %v671
  %v706 = vunpack.c.l.b16 %v672
  %v707 = vunpack.c.l.b16 %v673
  %v708 = vunpack.c.l.b16 %v674
  %v709 = vunpack.c.l.b16 %v675
  %v710 = vunpack.c.l.b16 %v676
  %v711 = vunpack.c.l.b16 %v677
  %v712 = vunpack.c.l.b16 %v678
  %v713 = vunpack.c.l.b16 %v679
  %v714 = vunpack.c.l.b16 %v680
  %v715 = vunpack.c.l.b16 %v681
  %v716 = vunpack.c.l.b16 %v682
  %v717 = vpack.c.b16 %v702, %v701
  %v718 = vpack.c.b16 %v704, %v703
  %v719 = vpack.c.b16 %v706, %v705
  %v720 = vpack.c.b16 %v708, %v707
  %v721 = vpack.c.b16 %v710, %v709
  %v722 = vpack.c.b16 %v712, %v711
  %v723 = vpack.c.b16 %v714, %v713
  %v724 = vpack.c.b16 %v716, %v715
  %733 = vmatpush.bf16.msra.mxu0 %v724
  %734 = vmatpush.bf16.msra.mxu0 %v723
  %735 = vmatpush.bf16.msra.mxu0 %v722
  %736 = vmatpush.bf16.msra.mxu0 %v721
  %737 = vmatpush.bf16.msra.mxu0 %v720
  %738 = vmatpush.bf16.msra.mxu0 %v719
  %739 = vmatpush.bf16.msra.mxu0 %v718
  %740 = vmatpush.bf16.msra.mxu0 %v717
  %741 = vmatmul.bf16.gmra.mxu0 %v665
  %v742 = vpop.f32.mrf.mxu0
  %v743 = vadd.f32 %v684, %v742
  %v744 = vpop.f32.mrf.mxu0
  %745 = vdwg.mxu0
  %v746 = vtanh.pop %v743
  %v747 = vpack.c.bf16 %v746, %v746
  %s748 = scalar_lea.vmem %s1, 448
  %v749 = vld [vmem:[%s748] sm:$0xf]
  %v750 = vld [vmem:[%s748 + $0x4] sm:$0xf]
  %v751 = vld [vmem:[%s748 + $0x8] sm:$0xf]
  %v752 = vld [vmem:[%s748 + $0xc] sm:$0xf]
  %v753 = vld [vmem:[%s748 + $0x10] sm:$0xf]
  %v754 = vld [vmem:[%s748 + $0x14] sm:$0xf]
  %v755 = vld [vmem:[%s748 + $0x18] sm:$0xf]
  %v756 = vld [vmem:[%s748 + $0x1c] sm:$0xf]
  %v757 = vld [vmem:[%s748 + $0x20] sm:$0xf]
  %v758 = vld [vmem:[%s748 + $0x24] sm:$0xf]
  %v759 = vld [vmem:[%s748 + $0x28] sm:$0xf]
  %v760 = vld [vmem:[%s748 + $0x2c] sm:$0xf]
  %v761 = vld [vmem:[%s748 + $0x30] sm:$0xf]
  %v762 = vld [vmem:[%s748 + $0x34] sm:$0xf]
  %v763 = vld [vmem:[%s748 + $0x38] sm:$0xf]
  %v764 = vld [vmem:[%s748 + $0x3c] sm:$0xf]
  %v765 = vld [vmem:[%s2 + $0x7] sm:$0x1]
  %v766 = vperm.slane %v765, 0
  %v783 = vunpack.c.l.b16 %v749
  %v784 = vunpack.c.l.b16 %v750
  %v785 = vunpack.c.l.b16 %v751
  %v786 = vunpack.c.l.b16 %v752
  %v787 = vunpack.c.l.b16 %v753
  %v788 = vunpack.c.l.b16 %v754
  %v789 = vunpack.c.l.b16 %v755
  %v790 = vunpack.c.l.b16 %v756
  %v791 = vunpack.c.l.b16 %v757
  %v792 = vunpack.c.l.b16 %v758
  %v793 = vunpack.c.l.b16 %v759
  %v794 = vunpack.c.l.b16 %v760
  %v795 = vunpack.c.l.b16 %v761
  %v796 = vunpack.c.l.b16 %v762
  %v797 = vunpack.c.l.b16 %v763
  %v798 = vunpack.c.l.b16 %v764
  %v799 = vpack.c.b16 %v784, %v783
  %v800 = vpack.c.b16 %v786, %v785
  %v801 = vpack.c.b16 %v788, %v787
  %v802 = vpack.c.b16 %v790, %v789
  %v803 = vpack.c.b16 %v792, %v791
  %v804 = vpack.c.b16 %v794, %v793
  %v805 = vpack.c.b16 %v796, %v795
  %v806 = vpack.c.b16 %v798, %v797
  %815 = vmatpush.bf16.msra.mxu0 %v806
  %816 = vmatpush.bf16.msra.mxu0 %v805
  %817 = vmatpush.bf16.msra.mxu0 %v804
  %818 = vmatpush.bf16.msra.mxu0 %v803
  %819 = vmatpush.bf16.msra.mxu0 %v802
  %820 = vmatpush.bf16.msra.mxu0 %v801
  %821 = vmatpush.bf16.msra.mxu0 %v800
  %822 = vmatpush.bf16.msra.mxu0 %v799
  %823 = vmatmul.bf16.gmra.mxu0 %v747
  %v824 = vpop.f32.mrf.mxu0
  %v825 = vadd.f32 %v766, %v824
  %v826 = vpop.f32.mrf.mxu0
  %827 = vdwg.mxu0
  %828 = vmax.xlane.f32.xlu0 %v825
  %v829 = vpop.xlane.xlu0 %828
  %v830 = vsub.f32 %v825, %v829
  %v831 = vmul.f32 %v830, 1.442695
  %v832 = vpow.pop %v831
  %833 = vmatpush.msra.mxu0 %v33
  %834 = vmatpush.msra.mxu0 %v32
  %835 = vmatpush.msra.mxu0 %v31
  %836 = vmatpush.msra.mxu0 %v30
  %837 = vmatpush.msra.mxu0 %v29
  %838 = vmatpush.msra.mxu0 %v28
  %839 = vmatpush.msra.mxu0 %v27
  %840 = vmatpush.msra.mxu0 %v26
  %841 = vmatpush.msra.mxu0 %v25
  %842 = vmatpush.msra.mxu0 %v24
  %843 = vmatpush.msra.mxu0 %v23
  %844 = vmatpush.msra.mxu0 %v22
  %845 = vmatpush.msra.mxu0 %v21
  %846 = vmatpush.msra.mxu0 %v20
  %847 = vmatpush.msra.mxu0 %v19
  %848 = vmatpush.msra.mxu0 %v18
  %849 = vmatmul.f32.gmra.mxu0 %v832
  %v850 = vpop.f32.mrf.mxu0
  %v851 = vadd.f32 0.0, %v850
  %852 = vdwg.mxu0
  %v853 = vrcp.pop %v851
  %v854 = vmul.f32 %v851, %v853
  %v855 = vsub.f32 1.0, %v854
  %v856 = vmul.f32 %v853, %v855
  %v857 = vadd.f32 %v853, %v856
  %vm858 = vweird.f32 %v851
  %vm859 = vweird.f32 %v853
  %vm860 = vmor %vm858, %vm859
  %v861 = vsel %vm860, %v853, %v857
  %v862 = vand.u32 2147483647, %v851
  %vm863 = vcmp.eq.f32.partialorder %v862, 8.507059e+37
  %v864 = vand.u32 %v851, 2147483648
  %v865 = vor.u32 1.1754944e-38, %v864
  %v866 = vsel %vm863, %v865, %v861
  %v867 = vmul.f32 %v832, %v866
  %868 = vst [vmem:[%s4] sm:$0xff] %v664
  %869 = vst [vmem:[%s4 + $0x8] sm:$0xff] %v541
  %870 = vst [vmem:[%s4 + $0x10] sm:$0xff] %v867
  // Predicated region
  $region18: #{dagmm_forward.1} parent=0 // pred_check
    _
  $region19: #{dagmm_forward.1} parent=0 // pred_check_branch
    %872 = sbr.rel (0) target = $region21
  $region20: #{dagmm_forward.1} parent=0 // pred_region
    _
  $region21: #{dagmm_forward.1} parent=0 // pred_fallthru
    _
  // Predicated region
  $region22: #{dagmm_forward.1} parent=0 // pred_check
    _
  $region23: #{dagmm_forward.1} parent=0 // pred_check_branch
    %874 = sbr.rel (0) target = $region25
  $region24: #{dagmm_forward.1} parent=0 // pred_region
    _
  $region25: #{dagmm_forward.1} parent=0 // pred_fallthru
    _

</llo_original>
